<compile_context>
chip_gen: v7x
topology: tpu7x:2x2x1
jax: 0.10.0
libtpu: 0.0.40
codegen_flags: <defaults>
</compile_context>

<pallas_src>
import jax
import jax.numpy as jnp
from jax.experimental import pallas as pl
from jax.experimental.pallas import tpu as pltpu


# ----------------------------- Pallas kernel -------------------------------

def _neg_scale_kernel(alpha_ref, g_ref, o_ref):
    """o = (-alpha) * g.  alpha lives in SMEM (traced scalar, no recompiles)."""
    neg_a = (-alpha_ref[0]).astype(o_ref.dtype)   # scalar path; VPU stays in native dtype
    o_ref[...] = g_ref[...] * neg_a


def _choose_tiling(n, itemsize):
    """Pick a lane-dense slab layout (rows, lane) plus a row-tile size.

    Prefers a wide lane dimension (unmasked `vst`, fewer/larger contiguous
    DMAs) and ~2 MiB blocks so the double-buffered in+out pipeline uses
    ~8 MiB of VMEM — comfortably within the default scoped-VMEM budget on
    v5e / v6e / v7x.
    """
    lane = None
    for cand in (4096, 2048, 1024, 512, 256, 128):
        if n % cand == 0:
            lane = cand
            break
    pad = 0
    if lane is None:              # ragged size: pad only the small tail to 128
        lane = 128
        pad = (-n) % lane
    rows = (n + pad) // lane

    target_rows = max(8, (2 << 20) // (lane * itemsize))   # ~2 MiB per block
    target_rows = (target_rows // 8) * 8                   # sublane multiple
    if rows <= target_rows:
        tile_r = rows             # single full-extent block (always legal)
    else:
        tile_r = target_rows      # multiple of 8 -> aligned, unmasked stores
    return lane, pad, rows, tile_r


def _neg_scale_pallas(g, alpha):
    """grad_in = -alpha * grad_out via a tiled, pipelined Pallas kernel."""
    orig_shape, dtype = g.shape, g.dtype
    n = g.size
    if n == 0:
        return g

    itemsize = jnp.dtype(dtype).itemsize
    lane, pad, rows, tile_r = _choose_tiling(n, itemsize)

    flat = g.reshape(-1)
    if pad:  # only for sizes not a multiple of 128 (one extra HBM copy; rare)
        flat = jnp.pad(flat, (0, pad))
    slab = flat.reshape(rows, lane)

    alpha_arr = jnp.asarray(alpha, dtype=jnp.float32).reshape((1,))

    out = pl.pallas_call(
        _neg_scale_kernel,
        out_shape=jax.ShapeDtypeStruct((rows, lane), dtype),
        grid=(pl.cdiv(rows, tile_r),),
        in_specs=[
            pl.BlockSpec(memory_space=pltpu.MemorySpace.SMEM),   # alpha scalar
            pl.BlockSpec((tile_r, lane), lambda i: (i, 0)),      # gradient tile
        ],
        out_specs=pl.BlockSpec((tile_r, lane), lambda i: (i, 0)),
        # Reuse the incoming gradient buffer for the output (same shape/dtype):
        # no extra gradient-sized HBM allocation.
        input_output_aliases={1: 0},
        compiler_params=pltpu.CompilerParams(
            # Row-block axis is independent -> shards across both TCs on v7x;
            # harmless on single-TC v5e/v6e.
            dimension_semantics=("parallel",),
        ),
    )(alpha_arr, slab)

    out = out.reshape(-1)
    if pad:
        out = out[:n]
    return out.reshape(orig_shape)


# ------------------------- GRL with custom gradient ------------------------

@jax.custom_vjp
def grl(x, alpha):
    """Gradient Reversal Layer: identity forward, -alpha * grad backward."""
    return x  # identity: no kernel, no extra HBM traffic


def _grl_fwd(x, alpha):
    return x, alpha


def _grl_bwd(alpha, g):
    # Matches PyTorch: (grad_output.neg() * alpha, None) -> zero cotangent for alpha.
    return _neg_scale_pallas(g, alpha), jnp.zeros((), dtype=jnp.float32)


grl.defvjp(_grl_fwd, _grl_bwd)


class GRL:
    """Mirror of the PyTorch GRL module (forward API + gradient semantics)."""

    def __init__(self, alpha):
        # Stored as a JAX scalar so it is traced (no kernel recompiles if the
        # caller anneals alpha over training).
        self.alpha = jnp.asarray(alpha, dtype=jnp.float32)

    def __call__(self, x):
        return grl(x, self.alpha)


# ----------------------------------- main ----------------------------------

if __name__ == "__main__":
    key = jax.random.PRNGKey(0)
    kx, kg = jax.random.split(key)

    # Small NCHW input consistent with a conv-feature GRL usage.
    x = jax.random.normal(kx, (2, 4, 16, 16), dtype=jnp.float32)
    alpha = 0.5
    module = GRL(alpha)

    # Forward: identity (no kernel, matches x.view_as(x)).
    y = jax.block_until_ready(module(x))
    assert y.shape == x.shape and y.dtype == x.dtype
    assert bool(jnp.allclose(y, x)), "forward must be identity"

    # Backward: exercises the Pallas gradient-reversal kernel with a
    # non-trivial cotangent.
    _, vjp_fn = jax.vjp(lambda v: grl(v, module.alpha), x)
    g = jax.random.normal(kg, x.shape, dtype=jnp.float32)
    gx, = vjp_fn(g)
    gx = jax.block_until_ready(gx)
    assert bool(jnp.allclose(gx, -alpha * g, atol=1e-6)), \
        "backward must be -alpha * grad_output"

    # Also check via jax.grad on a sum (cotangent of ones).
    grad = jax.block_until_ready(jax.grad(lambda v: jnp.sum(grl(v, module.alpha)))(x))
    assert bool(jnp.allclose(grad, -alpha * jnp.ones_like(x))), \
        "grad of sum must be -alpha * ones"

    # Sanity: a different alpha value reuses the same traced kernel (alpha in SMEM).
    _, vjp_fn2 = jax.vjp(lambda v: grl(v, jnp.float32(1.25)), x)
    gx2, = vjp_fn2(g)
    gx2 = jax.block_until_ready(gx2)
    assert bool(jnp.allclose(gx2, -1.25 * g, atol=1e-6))

    print("KERNEL_OK")
</pallas_src>

<mosaic_0001>
module attributes {stable_mosaic.version = 11 : i64} {
  func.func @_neg_scale_kernel(%arg0: i32, %arg1: memref<1xf32, #tpu.memory_space<smem>>, %arg2: memref<1x2048xf32, #tpu.memory_space<vmem>>, %arg3: memref<1x2048xf32, #tpu.memory_space<vmem>>) attributes {dimension_semantics = [#tpu.dimension_semantics<parallel>], iteration_bounds = array<i64: 1>, scalar_prefetch = 0 : i64, scratch_operands = 0 : i64, tpu.core_type = #tpu.core_type<tc>, window_params = [{transform_indices = @transform_0, window_bounds = array<i64: 1>}, {transform_indices = @transform_1, window_bounds = array<i64: 1, 2048>}, {transform_indices = @transform_2, window_bounds = array<i64: 1, 2048>}]} {
    %c0 = arith.constant 0 : index
    %0 = memref.load %arg1[%c0] : memref<1xf32, #tpu.memory_space<smem>>
    %cst = arith.constant 0.000000e+00 : f32
    %1 = arith.subf %cst, %0 : f32
    %c0_0 = arith.constant 0 : index
    %c0_1 = arith.constant 0 : index
    %2 = vector.load %arg2[%c0_0, %c0_1] : memref<1x2048xf32, #tpu.memory_space<vmem>>, vector<1x2048xf32>
    %3 = vector.broadcast %1 : f32 to vector<1x2048xf32>
    %4 = arith.mulf %2, %3 : vector<1x2048xf32>
    %c0_2 = arith.constant 0 : index
    %c0_3 = arith.constant 0 : index
    %5 = vector.load %arg3[%c0_2, %c0_3] : memref<1x2048xf32, #tpu.memory_space<vmem>>, vector<1x2048xf32>
    tpu.vector_store %arg3[%c0_2, %c0_3], %4 {strides = array<i32>} : memref<1x2048xf32, #tpu.memory_space<vmem>>, vector<1x2048xf32>,
    return
  }
  func.func @transform_0(%arg0: i32) -> i32 {
    %c0_i32 = arith.constant 0 : i32
    %c0_i32_0 = arith.constant 0 : i32
    return %c0_i32 : i32
  }
  func.func @transform_1(%arg0: i32) -> (i32, i32) {
    %c0_i32 = arith.constant 0 : i32
    %c0_i32_0 = arith.constant 0 : i32
    return %arg0, %c0_i32 : i32, i32
  }
  func.func @transform_2(%arg0: i32) -> (i32, i32) {
    %c0_i32 = arith.constant 0 : i32
    %c0_i32_0 = arith.constant 0 : i32
    return %arg0, %c0_i32 : i32, i32
  }
}

</mosaic_0001>

<llo_original>
// kernel: tpu_custom_call.1
$region0: #{tpu_custom_call.1}
  #allocation0 [shape = 'u32[]', space=smem, size = 0x4, offset = 0x4, fixed_abs, tag = 'smem constant byte address 0x4 - core index']
  #allocation1 [shape = 'u32[144,128]{1,0:T(1,128)}', space=vmem, size = 0x12000, scoped, tag = 'internal scratch']
  #allocation2 [shape = 'f32[1]{0:T(128)S(6)}', space=smem, size = 0x200, scoped, tag = 'scoped memory for tpu_custom_call.1']
  %s0 = inlined_call_operand.<no memory space> [shape: f32[1], index: 0, kind: input, shape index: {}]
  %s1 = inlined_call_operand.hbm [shape: f32[1,2048], index: 1, kind: input, shape index: {}, may-alias: {1,2}]
  %s2 = inlined_call_operand.hbm [shape: f32[1,2048], index: 2, kind: output, shape index: {}, may-alias: {1,2}]
  %s3 = sld [smem:[#allocation0]]
  $region22: #{tpu_custom_call.1} parent=0
    _
  %s5 = ssub.s32 1, %s3
  %s6 = scalar_select 0, %s5, %s3
  %7 = sst [smem:[#allocation2]] %s0
  $region1: #{tpu_custom_call.1} parent=0
    #allocation3 [shape = 'u8[8192]{0}', space=vmem, size = 0x2000, scoped, tag = 'input window, operand 1, single buffered']
    #allocation4 [shape = 's32[1]{0}', space=sflag, size = 0x4, scoped, tag = 'scoped memory for tpu_custom_call.1']
    #allocation5 [shape = 's32[1]{0}', space=sflag, size = 0x4, scoped, tag = 'scoped memory for tpu_custom_call.1']
    #allocation6 [shape = 'u8[8192]{0}', space=vmem, size = 0x2000, scoped, tag = 'output window, operand 0, single buffered']
    %8 = vsyncpa [#allocation4], 0
    %9 = vsyncpa [#allocation5], 0
    // Predicated region
    $region2: #{tpu_custom_call.1} parent=1 // pred_check
      _
    $region3: #{tpu_custom_call.1} parent=1 // pred_check_branch
      %11 = sbr.rel (0) target = $region5
    $region4: #{tpu_custom_call.1} parent=1 // pred_region
      _
    $region5: #{tpu_custom_call.1} parent=1 // pred_fallthru
      _
    // Predicated region
    $region6: #{tpu_custom_call.1} parent=1 // pred_check
      _
    $region7: #{tpu_custom_call.1} parent=1 // pred_check_branch
      %13 = sbr.rel (0) target = $region9
    $region8: #{tpu_custom_call.1} parent=1 // pred_region
      %s15 = ssub.s32 256, 256
      %16 = vsyncadd [#allocation4], %s15
      %s18 = sshll.u32 [#allocation3], 4
      %s19 = int_to_ptr.vmem [resolvable:$true] %s18
      %21 = dma.hbm_to_vmem [thread:$0]  %s1, 256, %s19, [#allocation4]
    $region9: #{tpu_custom_call.1} parent=1 // pred_fallthru
      _
    // Predicated region
    $region10: #{tpu_custom_call.1} parent=1 // pred_check
      _
    $region11: #{tpu_custom_call.1} parent=1 // pred_check_branch
      %23 = sbr.rel (0) target = $region13
    $region12: #{tpu_custom_call.1} parent=1 // pred_region
      %24 = dma.done [#allocation4], 256
    $region13: #{tpu_custom_call.1} parent=1 // pred_fallthru
      _
    %s25 = sld [smem:[#allocation2]]
    %s26 = ssub.f32 0.0, %s25
    %v27 = vld [vmem:[#allocation3] sm:$0xff]
    %v28 = vld [vmem:[#allocation3 + $0x8] sm:$0xff]
    %v29 = vstv %s26
    %v30 = vmul.f32 %v27, %v29
    %v31 = vmul.f32 %v28, %v29
    %32 = vst [vmem:[#allocation6] sm:$0xff] %v30
    %33 = vst [vmem:[#allocation6 + $0x8] sm:$0xff] %v31
    // Predicated region
    $region14: #{tpu_custom_call.1} parent=1 // pred_check
      _
    $region15: #{tpu_custom_call.1} parent=1 // pred_check_branch
      %35 = sbr.rel (0) target = $region17
    $region16: #{tpu_custom_call.1} parent=1 // pred_region
      %s37 = ssub.s32 256, 256
      %38 = vsyncadd [#allocation5], %s37
      %s40 = sshll.u32 [#allocation6], 4
      %s41 = int_to_ptr.vmem [resolvable:$true] %s40
      %43 = dma.vmem_to_hbm [thread:$0]  %s41, 256, %s2, [#allocation5]
    $region17: #{tpu_custom_call.1} parent=1 // pred_fallthru
      _
    // Predicated region
    $region18: #{tpu_custom_call.1} parent=1 // pred_check
      _
    $region19: #{tpu_custom_call.1} parent=1 // pred_check_branch
      %45 = sbr.rel (0) target = $region21
    $region20: #{tpu_custom_call.1} parent=1 // pred_region
      %46 = dma.done [#allocation5], 256
    $region21: #{tpu_custom_call.1} parent=1 // pred_fallthru
      _
    %47 = vsyncpa [#allocation4], 1
    %48 = vsyncpa [#allocation5], 1

</llo_original>
